<compile_context>
chip_gen: v6e
topology: v6e:2x2x1
jax: 0.10.0
libtpu: 0.0.40
codegen_flags: <defaults>
</compile_context>

<pallas_src>
import functools

import jax
import jax.numpy as jnp
import numpy as np
from jax.experimental import pallas as pl
from jax.experimental.pallas import tpu as pltpu


def channel_gate_kernel(x_ref, gid_ref, wa_ref, b1_ref, w2e_ref, b2e_ref,
                        o_ref, *, group):
    """One (tb, C*L) lane-dense block; lane c*L + l holds x[b, c, l]."""
    x = x_ref[...]                       # (tb, CL), input dtype
    gid = gid_ref[...]                   # (1, CL) int32: lane -> channel id
    wa = wa_ref[...]                     # (H, CL) f32: W1[c, j] / L per lane
    b1 = b1_ref[...]                     # (1, H)  f32
    w2e = w2e_ref[...]                   # (H, CL) f32: W2[c, j] per lane
    b2e = b2e_ref[...]                   # (1, CL) f32: 2 * b2[c] per lane
    hidden = wa.shape[0]
    cl = x.shape[-1]

    # ---- max-pool over L: segmented shift-reduce on the lane axis ---------
    # Two-sided doubling; contributions whose rolled channel-id differs are
    # replaced by -inf, so the reduce never crosses a channel boundary (and
    # is independent of roll direction / circular wraparound).  After the
    # loop every lane holds the max over its own channel's `group` lanes.
    # Runs in the input dtype (max is exact).
    m = x
    reach = 1
    while reach < group:
        for shift in (reach, (cl - reach) % cl):
            rolled = pltpu.roll(m, shift, 1)
            same = pltpu.roll(gid, shift, 1) == gid
            m = jnp.maximum(m, jnp.where(same, rolled, -jnp.inf))
        reach *= 2

    xf = x.astype(jnp.float32)
    mf = m.astype(jnp.float32)

    # ---- shared MLP (f32), evaluated per pool branch, then summed ---------
    # Layer 1 is a weighted full-lane reduce against W1/L (the avg-pool 1/L is
    # folded into the weights; the max branch reuses them because every lane
    # already carries its group max).  Layer 2 expands directly onto the lane
    # axis via the per-row scalars h[j] and the lane-expanded W2 / 2*b2, so
    # the sigmoid scale is produced in the (tb, C*L) layout.
    att = b2e                                                # (1, CL)
    for j in range(hidden):
        wa_j = wa[j:j + 1]                                   # (1, CL)
        b1_j = b1[:, j:j + 1]                                # (1, 1)
        pre_avg = jnp.sum(xf * wa_j, axis=1, keepdims=True)  # (tb, 1)
        pre_max = jnp.sum(mf * wa_j, axis=1, keepdims=True)  # (tb, 1)
        h_j = (jnp.maximum(pre_avg + b1_j, 0.0) +
               jnp.maximum(pre_max + b1_j, 0.0))             # (tb, 1)
        att = att + h_j * w2e[j:j + 1]                       # (tb, CL)

    scale = jax.nn.sigmoid(att)                              # (tb, CL) f32
    # Final multiply in the input dtype; store stays unmasked / lane-dense.
    o_ref[...] = (x * scale.astype(x.dtype)).astype(o_ref.dtype)


def _padded_block_bytes(rows, lanes, itemsize):
    # VMEM tiles are padded to (8, 128) granules.
    return (pl.cdiv(rows, 8) * 8) * (pl.cdiv(lanes, 128) * 128) * itemsize


def _vmem_footprint_bytes(tb, cl, itemsize):
    blk_in = _padded_block_bytes(tb, cl, itemsize)    # x / out block
    blk_f32 = _padded_block_bytes(tb, cl, 4)          # f32 temporaries
    params = 4 * 2 * _padded_block_bytes(8, cl, 4)    # lane-expanded weights
    # 2x double-buffered input + 2x double-buffered output + ~5 live
    # block-sized temporaries (max tree, products, att, scale, store staging).
    return 2 * blk_in + 2 * blk_in + 5 * blk_f32 + params


def _vmem_budget_bytes():
    # Per-generation budget: stay well inside the default scoped-VMEM limit
    # (16 MiB on v5e, 32 MiB on v6e/v7x; physical VMEM 128/128/64 MiB).
    try:
        physical = pltpu.get_tpu_info().vmem_capacity_bytes
    except Exception:
        physical = 64 << 20       # conservative: assume v7x (smallest VMEM)
    return min(12 << 20, physical // 4)


def _pick_batch_tile(B, cl, itemsize, vmem_budget_bytes):
    """Batch rows per grid step for lane-dense (tb, C*L) blocks."""
    if B <= 8:
        return B
    # ~1 MiB lane-dense input blocks already sit at the HBM roofline; beyond
    # that, spend headroom on more grid steps (pipeline overlap), not size.
    tb = min(B, max(8, (1 << 20) // max(1, cl * itemsize)))
    # Keep >= 8 grid steps when the batch allows it (>= 4 per v7x TensorCore).
    tb = min(tb, max(8, pl.cdiv(B, 8)))
    tb = max(8, (tb // 8) * 8)                    # 8-sublane granularity
    while tb > 8 and _vmem_footprint_bytes(tb, cl, itemsize) > vmem_budget_bytes:
        tb -= 8
    return tb


def channel_gate(x, w1, b1, w2, b2, *, batch_tile=None):
    """ChannelGate forward.

    x : (B, C, L)  PyTorch NCL layout (only a free reshape, no transpose).
    w1: (C, H)     torch mlp Linear1 weight, transposed to (in, out).
    b1: (1, H)     torch mlp Linear1 bias.
    w2: (C, H)     torch mlp Linear2 weight, native (out, in) layout.
    b2: (C, 1)     torch mlp Linear2 bias.
    """
    B, C, L = x.shape
    H = w1.shape[1]
    CL = C * L

    # Free contiguous view of NCL: lane c*L + l holds x[b, c, l].
    x_flat = x.reshape(B, CL)

    # Lane-expanded parameters (tiny; built once per call outside the kernel).
    f32 = jnp.float32
    wa = jnp.repeat(w1.astype(f32).T, L, axis=1) / L                 # (H, CL)
    w2e = jnp.repeat(w2.astype(f32).T, L, axis=1)                    # (H, CL)
    b2e = jnp.repeat(2.0 * b2.astype(f32).reshape(1, C), L, axis=1)  # (1, CL)
    gid = jnp.repeat(jnp.arange(C, dtype=jnp.int32).reshape(1, C), L, axis=1)
    b1f = b1.astype(f32).reshape(1, H)

    budget = _vmem_budget_bytes()
    tb = batch_tile if batch_tile is not None else _pick_batch_tile(
        B, CL, x.dtype.itemsize, budget)
    tb = min(tb, B)
    grid = (pl.cdiv(B, tb),)      # trailing partial block is masked on store

    footprint = _vmem_footprint_bytes(tb, CL, x.dtype.itemsize)
    vmem_limit = int(min(32 << 20, max(16 << 20, 2 * footprint)))

    # TODO(synk): if C*L ever outgrows the per-block VMEM budget, add an
    # "arbitrary" L-tiling grid axis with running mean/max accumulators and a
    # second sweep to apply the scale; not needed at pillar-VFE sizes.
    kernel = functools.partial(channel_gate_kernel, group=L)
    out_flat = pl.pallas_call(
        kernel,
        out_shape=jax.ShapeDtypeStruct((B, CL), x.dtype),
        grid_spec=pltpu.PrefetchScalarGridSpec(
            num_scalar_prefetch=0,
            grid=grid,
            in_specs=[
                pl.BlockSpec((tb, CL), lambda b: (b, 0)),   # x (lane-dense)
                pl.BlockSpec((1, CL), lambda b: (0, 0)),    # gid
                pl.BlockSpec((H, CL), lambda b: (0, 0)),    # wa
                pl.BlockSpec((1, H), lambda b: (0, 0)),     # b1
                pl.BlockSpec((H, CL), lambda b: (0, 0)),    # w2e
                pl.BlockSpec((1, CL), lambda b: (0, 0)),    # b2e
            ],
            out_specs=pl.BlockSpec((tb, CL), lambda b: (b, 0)),
        ),
        compiler_params=pltpu.CompilerParams(
            dimension_semantics=("parallel",),
            vmem_limit_bytes=vmem_limit),
        # Callers that do not reuse x can also pass input_output_aliases={0: 0}
        # to save the output HBM allocation; if a v7x profile still shows
        # exposed input DMA, add pipeline_mode=pl.Buffered(3) on the x spec.
    )(x_flat, gid, wa, b1f, w2e, b2e)

    return out_flat.reshape(B, C, L)


def channel_gate_reference(x, w1, b1, w2, b2):
    """Pure-JAX reference implementing the PyTorch forward exactly (f32)."""
    hp = jax.lax.Precision.HIGHEST
    avg = jnp.mean(x, axis=2)                        # (B, C)
    mx = jnp.max(x, axis=2)                          # (B, C)

    def mlp(p):
        h = jnp.maximum(jnp.dot(p, w1, precision=hp) + b1[0], 0.0)
        return jnp.dot(h, w2.T, precision=hp) + b2[:, 0]

    scale = jax.nn.sigmoid(mlp(avg) + mlp(mx))[:, :, None]
    return x * scale


if __name__ == "__main__":
    # Shapes consistent with the module: gate_channels=32, reduction_ratio=16.
    B, C, L = 2, 32, 16
    H = C // 16                                      # hidden = 2

    key = jax.random.PRNGKey(0)
    kx, k1, k2, k3, k4 = jax.random.split(key, 5)

    x = jax.random.normal(kx, (B, C, L), dtype=jnp.float32)
    w1 = jax.random.normal(k1, (C, H), dtype=jnp.float32) * 0.1
    b1 = jax.random.normal(k2, (1, H), dtype=jnp.float32) * 0.1
    w2 = jax.random.normal(k3, (C, H), dtype=jnp.float32) * 0.1
    b2 = jax.random.normal(k4, (C, 1), dtype=jnp.float32) * 0.1

    out = jax.block_until_ready(channel_gate(x, w1, b1, w2, b2))
    ref = jax.block_until_ready(channel_gate_reference(x, w1, b1, w2, b2))
    np.testing.assert_allclose(np.asarray(out), np.asarray(ref),
                               rtol=1e-4, atol=1e-5)

    print("KERNEL_OK")
</pallas_src>

<mosaic_0001>
module attributes {stable_mosaic.version = 11 : i64} {
  func.func @channel_gate_kernel(%arg0: i32, %arg1: memref<2x512xf32, #tpu.memory_space<vmem>>, %arg2: memref<1x512xi32, #tpu.memory_space<vmem>>, %arg3: memref<2x512xf32, #tpu.memory_space<vmem>>, %arg4: memref<1x2xf32, #tpu.memory_space<vmem>>, %arg5: memref<2x512xf32, #tpu.memory_space<vmem>>, %arg6: memref<1x512xf32, #tpu.memory_space<vmem>>, %arg7: memref<2x512xf32, #tpu.memory_space<vmem>>) attributes {dimension_semantics = [#tpu.dimension_semantics<parallel>], iteration_bounds = array<i64: 1>, scalar_prefetch = 0 : i64, scratch_operands = 0 : i64, tpu.core_type = #tpu.core_type<tc>, window_params = [{transform_indices = @transform_0, window_bounds = array<i64: 2, 512>}, {pipeline_mode = #tpu.pipeline_mode<synchronous>, transform_indices = @transform_1, window_bounds = array<i64: 1, 512>}, {pipeline_mode = #tpu.pipeline_mode<synchronous>, transform_indices = @transform_2, window_bounds = array<i64: 2, 512>}, {pipeline_mode = #tpu.pipeline_mode<synchronous>, transform_indices = @transform_3, window_bounds = array<i64: 1, 2>}, {pipeline_mode = #tpu.pipeline_mode<synchronous>, transform_indices = @transform_4, window_bounds = array<i64: 2, 512>}, {pipeline_mode = #tpu.pipeline_mode<synchronous>, transform_indices = @transform_5, window_bounds = array<i64: 1, 512>}, {transform_indices = @transform_6, window_bounds = array<i64: 2, 512>}]} {
    %c0 = arith.constant 0 : index
    %c0_0 = arith.constant 0 : index
    %0 = vector.load %arg1[%c0, %c0_0] : memref<2x512xf32, #tpu.memory_space<vmem>>, vector<2x512xf32>
    %c0_1 = arith.constant 0 : index
    %c0_2 = arith.constant 0 : index
    %1 = vector.load %arg2[%c0_1, %c0_2] : memref<1x512xi32, #tpu.memory_space<vmem>>, vector<1x512xi32>
    %c0_3 = arith.constant 0 : index
    %c0_4 = arith.constant 0 : index
    %2 = vector.load %arg3[%c0_3, %c0_4] : memref<2x512xf32, #tpu.memory_space<vmem>>, vector<2x512xf32>
    %c0_5 = arith.constant 0 : index
    %c0_6 = arith.constant 0 : index
    %3 = vector.load %arg4[%c0_5, %c0_6] : memref<1x2xf32, #tpu.memory_space<vmem>>, vector<1x2xf32>
    %c0_7 = arith.constant 0 : index
    %c0_8 = arith.constant 0 : index
    %4 = vector.load %arg5[%c0_7, %c0_8] : memref<2x512xf32, #tpu.memory_space<vmem>>, vector<2x512xf32>
    %c0_9 = arith.constant 0 : index
    %c0_10 = arith.constant 0 : index
    %5 = vector.load %arg6[%c0_9, %c0_10] : memref<1x512xf32, #tpu.memory_space<vmem>>, vector<1x512xf32>
    %c1_i32 = arith.constant 1 : i32
    %6 = tpu.dynamic_rotate %0 by %c1_i32 dim 1 : vector<2x512xf32>, i32 -> vector<2x512xf32>
    %c1_i32_11 = arith.constant 1 : i32
    %7 = tpu.dynamic_rotate %1 by %c1_i32_11 dim 1 : vector<1x512xi32>, i32 -> vector<1x512xi32>
    %8 = arith.cmpi eq, %7, %1 : vector<1x512xi32>
    %cst = arith.constant 0xFF800000 : f32
    %9 = vector.shape_cast %8 : vector<1x512xi1> to vector<1x512xi1>
    %10 = vector.broadcast %9 : vector<1x512xi1> to vector<2x512xi1>
    %11 = vector.broadcast %cst : f32 to vector<2x512xf32>
    %12 = arith.select %10, %6, %11 : vector<2x512xi1>, vector<2x512xf32>
    %13 = arith.maximumf %0, %12 : vector<2x512xf32>
    %c511_i32 = arith.constant 511 : i32
    %14 = tpu.dynamic_rotate %13 by %c511_i32 dim 1 : vector<2x512xf32>, i32 -> vector<2x512xf32>
    %c511_i32_12 = arith.constant 511 : i32
    %15 = tpu.dynamic_rotate %1 by %c511_i32_12 dim 1 : vector<1x512xi32>, i32 -> vector<1x512xi32>
    %16 = arith.cmpi eq, %15, %1 : vector<1x512xi32>
    %cst_13 = arith.constant 0xFF800000 : f32
    %17 = vector.shape_cast %16 : vector<1x512xi1> to vector<1x512xi1>
    %18 = vector.broadcast %17 : vector<1x512xi1> to vector<2x512xi1>
    %19 = vector.broadcast %cst_13 : f32 to vector<2x512xf32>
    %20 = arith.select %18, %14, %19 : vector<2x512xi1>, vector<2x512xf32>
    %21 = arith.maximumf %13, %20 : vector<2x512xf32>
    %c2_i32 = arith.constant 2 : i32
    %22 = tpu.dynamic_rotate %21 by %c2_i32 dim 1 : vector<2x512xf32>, i32 -> vector<2x512xf32>
    %c2_i32_14 = arith.constant 2 : i32
    %23 = tpu.dynamic_rotate %1 by %c2_i32_14 dim 1 : vector<1x512xi32>, i32 -> vector<1x512xi32>
    %24 = arith.cmpi eq, %23, %1 : vector<1x512xi32>
    %cst_15 = arith.constant 0xFF800000 : f32
    %25 = vector.shape_cast %24 : vector<1x512xi1> to vector<1x512xi1>
    %26 = vector.broadcast %25 : vector<1x512xi1> to vector<2x512xi1>
    %27 = vector.broadcast %cst_15 : f32 to vector<2x512xf32>
    %28 = arith.select %26, %22, %27 : vector<2x512xi1>, vector<2x512xf32>
    %29 = arith.maximumf %21, %28 : vector<2x512xf32>
    %c510_i32 = arith.constant 510 : i32
    %30 = tpu.dynamic_rotate %29 by %c510_i32 dim 1 : vector<2x512xf32>, i32 -> vector<2x512xf32>
    %c510_i32_16 = arith.constant 510 : i32
    %31 = tpu.dynamic_rotate %1 by %c510_i32_16 dim 1 : vector<1x512xi32>, i32 -> vector<1x512xi32>
    %32 = arith.cmpi eq, %31, %1 : vector<1x512xi32>
    %cst_17 = arith.constant 0xFF800000 : f32
    %33 = vector.shape_cast %32 : vector<1x512xi1> to vector<1x512xi1>
    %34 = vector.broadcast %33 : vector<1x512xi1> to vector<2x512xi1>
    %35 = vector.broadcast %cst_17 : f32 to vector<2x512xf32>
    %36 = arith.select %34, %30, %35 : vector<2x512xi1>, vector<2x512xf32>
    %37 = arith.maximumf %29, %36 : vector<2x512xf32>
    %c4_i32 = arith.constant 4 : i32
    %38 = tpu.dynamic_rotate %37 by %c4_i32 dim 1 : vector<2x512xf32>, i32 -> vector<2x512xf32>
    %c4_i32_18 = arith.constant 4 : i32
    %39 = tpu.dynamic_rotate %1 by %c4_i32_18 dim 1 : vector<1x512xi32>, i32 -> vector<1x512xi32>
    %40 = arith.cmpi eq, %39, %1 : vector<1x512xi32>
    %cst_19 = arith.constant 0xFF800000 : f32
    %41 = vector.shape_cast %40 : vector<1x512xi1> to vector<1x512xi1>
    %42 = vector.broadcast %41 : vector<1x512xi1> to vector<2x512xi1>
    %43 = vector.broadcast %cst_19 : f32 to vector<2x512xf32>
    %44 = arith.select %42, %38, %43 : vector<2x512xi1>, vector<2x512xf32>
    %45 = arith.maximumf %37, %44 : vector<2x512xf32>
    %c508_i32 = arith.constant 508 : i32
    %46 = tpu.dynamic_rotate %45 by %c508_i32 dim 1 : vector<2x512xf32>, i32 -> vector<2x512xf32>
    %c508_i32_20 = arith.constant 508 : i32
    %47 = tpu.dynamic_rotate %1 by %c508_i32_20 dim 1 : vector<1x512xi32>, i32 -> vector<1x512xi32>
    %48 = arith.cmpi eq, %47, %1 : vector<1x512xi32>
    %cst_21 = arith.constant 0xFF800000 : f32
    %49 = vector.shape_cast %48 : vector<1x512xi1> to vector<1x512xi1>
    %50 = vector.broadcast %49 : vector<1x512xi1> to vector<2x512xi1>
    %51 = vector.broadcast %cst_21 : f32 to vector<2x512xf32>
    %52 = arith.select %50, %46, %51 : vector<2x512xi1>, vector<2x512xf32>
    %53 = arith.maximumf %45, %52 : vector<2x512xf32>
    %c8_i32 = arith.constant 8 : i32
    %54 = tpu.dynamic_rotate %53 by %c8_i32 dim 1 : vector<2x512xf32>, i32 -> vector<2x512xf32>
    %c8_i32_22 = arith.constant 8 : i32
    %55 = tpu.dynamic_rotate %1 by %c8_i32_22 dim 1 : vector<1x512xi32>, i32 -> vector<1x512xi32>
    %56 = arith.cmpi eq, %55, %1 : vector<1x512xi32>
    %cst_23 = arith.constant 0xFF800000 : f32
    %57 = vector.shape_cast %56 : vector<1x512xi1> to vector<1x512xi1>
    %58 = vector.broadcast %57 : vector<1x512xi1> to vector<2x512xi1>
    %59 = vector.broadcast %cst_23 : f32 to vector<2x512xf32>
    %60 = arith.select %58, %54, %59 : vector<2x512xi1>, vector<2x512xf32>
    %61 = arith.maximumf %53, %60 : vector<2x512xf32>
    %c504_i32 = arith.constant 504 : i32
    %62 = tpu.dynamic_rotate %61 by %c504_i32 dim 1 : vector<2x512xf32>, i32 -> vector<2x512xf32>
    %c504_i32_24 = arith.constant 504 : i32
    %63 = tpu.dynamic_rotate %1 by %c504_i32_24 dim 1 : vector<1x512xi32>, i32 -> vector<1x512xi32>
    %64 = arith.cmpi eq, %63, %1 : vector<1x512xi32>
    %cst_25 = arith.constant 0xFF800000 : f32
    %65 = vector.shape_cast %64 : vector<1x512xi1> to vector<1x512xi1>
    %66 = vector.broadcast %65 : vector<1x512xi1> to vector<2x512xi1>
    %67 = vector.broadcast %cst_25 : f32 to vector<2x512xf32>
    %68 = arith.select %66, %62, %67 : vector<2x512xi1>, vector<2x512xf32>
    %69 = arith.maximumf %61, %68 : vector<2x512xf32>
    %70 = vector.extract_strided_slice %2 {offsets = [0, 0], sizes = [1, 512], strides = [1, 1]} : vector<2x512xf32> to vector<1x512xf32>
    %71 = vector.extract_strided_slice %3 {offsets = [0, 0], sizes = [1, 1], strides = [1, 1]} : vector<1x2xf32> to vector<1x1xf32>
    %72 = vector.broadcast %70 : vector<1x512xf32> to vector<2x512xf32>
    %73 = arith.mulf %0, %72 : vector<2x512xf32>
    %cst_26 = arith.constant dense<0.000000e+00> : vector<2xf32>
    %74 = vector.multi_reduction <add>, %73, %cst_26 [1] : vector<2x512xf32> to vector<2xf32>
    %75 = vector.shape_cast %74 : vector<2xf32> to vector<2x1xf32>
    %76 = vector.broadcast %70 : vector<1x512xf32> to vector<2x512xf32>
    %77 = arith.mulf %69, %76 : vector<2x512xf32>
    %cst_27 = arith.constant dense<0.000000e+00> : vector<2xf32>
    %78 = vector.multi_reduction <add>, %77, %cst_27 [1] : vector<2x512xf32> to vector<2xf32>
    %79 = vector.shape_cast %78 : vector<2xf32> to vector<2x1xf32>
    %80 = vector.broadcast %71 : vector<1x1xf32> to vector<2x1xf32>
    %81 = arith.addf %75, %80 : vector<2x1xf32>
    %cst_28 = arith.constant 0.000000e+00 : f32
    %82 = vector.broadcast %cst_28 : f32 to vector<2x1xf32>
    %83 = arith.maximumf %81, %82 : vector<2x1xf32>
    %84 = vector.broadcast %71 : vector<1x1xf32> to vector<2x1xf32>
    %85 = arith.addf %79, %84 : vector<2x1xf32>
    %cst_29 = arith.constant 0.000000e+00 : f32
    %86 = vector.broadcast %cst_29 : f32 to vector<2x1xf32>
    %87 = arith.maximumf %85, %86 : vector<2x1xf32>
    %88 = arith.addf %83, %87 : vector<2x1xf32>
    %89 = vector.extract_strided_slice %4 {offsets = [0, 0], sizes = [1, 512], strides = [1, 1]} : vector<2x512xf32> to vector<1x512xf32>
    %90 = vector.broadcast %88 : vector<2x1xf32> to vector<2x512xf32>
    %91 = vector.broadcast %89 : vector<1x512xf32> to vector<2x512xf32>
    %92 = arith.mulf %90, %91 : vector<2x512xf32>
    %93 = vector.broadcast %5 : vector<1x512xf32> to vector<2x512xf32>
    %94 = arith.addf %93, %92 : vector<2x512xf32>
    %95 = vector.extract_strided_slice %2 {offsets = [1, 0], sizes = [1, 512], strides = [1, 1]} : vector<2x512xf32> to vector<1x512xf32>
    %96 = vector.extract_strided_slice %3 {offsets = [0, 1], sizes = [1, 1], strides = [1, 1]} : vector<1x2xf32> to vector<1x1xf32>
    %97 = vector.broadcast %95 : vector<1x512xf32> to vector<2x512xf32>
    %98 = arith.mulf %0, %97 : vector<2x512xf32>
    %cst_30 = arith.constant dense<0.000000e+00> : vector<2xf32>
    %99 = vector.multi_reduction <add>, %98, %cst_30 [1] : vector<2x512xf32> to vector<2xf32>
    %100 = vector.shape_cast %99 : vector<2xf32> to vector<2x1xf32>
    %101 = vector.broadcast %95 : vector<1x512xf32> to vector<2x512xf32>
    %102 = arith.mulf %69, %101 : vector<2x512xf32>
    %cst_31 = arith.constant dense<0.000000e+00> : vector<2xf32>
    %103 = vector.multi_reduction <add>, %102, %cst_31 [1] : vector<2x512xf32> to vector<2xf32>
    %104 = vector.shape_cast %103 : vector<2xf32> to vector<2x1xf32>
    %105 = vector.broadcast %96 : vector<1x1xf32> to vector<2x1xf32>
    %106 = arith.addf %100, %105 : vector<2x1xf32>
    %cst_32 = arith.constant 0.000000e+00 : f32
    %107 = vector.broadcast %cst_32 : f32 to vector<2x1xf32>
    %108 = arith.maximumf %106, %107 : vector<2x1xf32>
    %109 = vector.broadcast %96 : vector<1x1xf32> to vector<2x1xf32>
    %110 = arith.addf %104, %109 : vector<2x1xf32>
    %cst_33 = arith.constant 0.000000e+00 : f32
    %111 = vector.broadcast %cst_33 : f32 to vector<2x1xf32>
    %112 = arith.maximumf %110, %111 : vector<2x1xf32>
    %113 = arith.addf %108, %112 : vector<2x1xf32>
    %114 = vector.extract_strided_slice %4 {offsets = [1, 0], sizes = [1, 512], strides = [1, 1]} : vector<2x512xf32> to vector<1x512xf32>
    %115 = vector.broadcast %113 : vector<2x1xf32> to vector<2x512xf32>
    %116 = vector.broadcast %114 : vector<1x512xf32> to vector<2x512xf32>
    %117 = arith.mulf %115, %116 : vector<2x512xf32>
    %118 = arith.addf %94, %117 : vector<2x512xf32>
    %119 = arith.negf %118 : vector<2x512xf32>
    %120 = math.exp %119 : vector<2x512xf32>
    %cst_34 = arith.constant 1.000000e+00 : f32
    %121 = vector.broadcast %cst_34 : f32 to vector<2x512xf32>
    %122 = arith.addf %121, %120 : vector<2x512xf32>
    %123 = arith.divf %121, %122 : vector<2x512xf32>
    %124 = arith.mulf %0, %123 : vector<2x512xf32>
    %c0_35 = arith.constant 0 : index
    %c0_36 = arith.constant 0 : index
    %125 = vector.load %arg7[%c0_35, %c0_36] : memref<2x512xf32, #tpu.memory_space<vmem>>, vector<2x512xf32>
    tpu.vector_store %arg7[%c0_35, %c0_36], %124 {strides = array<i32>} : memref<2x512xf32, #tpu.memory_space<vmem>>, vector<2x512xf32>,
    return
  }
  func.func @transform_0(%arg0: i32) -> (i32, i32) {
    %c0_i32 = arith.constant 0 : i32
    %c0_i32_0 = arith.constant 0 : i32
    return %arg0, %c0_i32 : i32, i32
  }
  func.func @transform_1(%arg0: i32) -> (i32, i32) {
    %c0_i32 = arith.constant 0 : i32
    %c0_i32_0 = arith.constant 0 : i32
    %c0_i32_1 = arith.constant 0 : i32
    return %c0_i32, %c0_i32_0 : i32, i32
  }
  func.func @transform_2(%arg0: i32) -> (i32, i32) {
    %c0_i32 = arith.constant 0 : i32
    %c0_i32_0 = arith.constant 0 : i32
    %c0_i32_1 = arith.constant 0 : i32
    return %c0_i32, %c0_i32_0 : i32, i32
  }
  func.func @transform_3(%arg0: i32) -> (i32, i32) {
    %c0_i32 = arith.constant 0 : i32
    %c0_i32_0 = arith.constant 0 : i32
    %c0_i32_1 = arith.constant 0 : i32
    return %c0_i32, %c0_i32_0 : i32, i32
  }
  func.func @transform_4(%arg0: i32) -> (i32, i32) {
    %c0_i32 = arith.constant 0 : i32
    %c0_i32_0 = arith.constant 0 : i32
    %c0_i32_1 = arith.constant 0 : i32
    return %c0_i32, %c0_i32_0 : i32, i32
  }
  func.func @transform_5(%arg0: i32) -> (i32, i32) {
    %c0_i32 = arith.constant 0 : i32
    %c0_i32_0 = arith.constant 0 : i32
    %c0_i32_1 = arith.constant 0 : i32
    return %c0_i32, %c0_i32_0 : i32, i32
  }
  func.func @transform_6(%arg0: i32) -> (i32, i32) {
    %c0_i32 = arith.constant 0 : i32
    %c0_i32_0 = arith.constant 0 : i32
    return %arg0, %c0_i32 : i32, i32
  }
}

</mosaic_0001>

<llo_original>
// kernel: tpu_custom_call.1
$region0: #{tpu_custom_call.1}
  #allocation0 [shape = 'u32[]', space=smem, size = 0x4, offset = 0x4, fixed_abs, tag = 'smem constant byte address 0x4 - core index']
  #allocation1 [shape = 'u32[144,128]{1,0:T(1,128)}', space=vmem, size = 0x12000, scoped, tag = 'internal scratch']
  %s0 = inlined_call_operand.hbm [shape: f32[2,512], index: 0, kind: input, shape index: {}]
  %s1 = inlined_call_operand.hbm [shape: s32[1,512], index: 1, kind: input, shape index: {}]
  %s2 = inlined_call_operand.hbm [shape: f32[2,512], index: 2, kind: input, shape index: {}]
  %s3 = inlined_call_operand.vmem [shape: f32[1,2], index: 3, kind: input, shape index: {}]
  %s4 = inlined_call_operand.hbm [shape: f32[2,512], index: 4, kind: input, shape index: {}]
  %s5 = inlined_call_operand.vmem [shape: f32[1,512], index: 5, kind: input, shape index: {}]
  %s6 = inlined_call_operand.hbm [shape: f32[2,512], index: 6, kind: output, shape index: {}]
  %s7 = sld [smem:[#allocation0]]
  $region50: #{tpu_custom_call.1} parent=0
    _
  %s9 = ssub.s32 1, %s7
  %s10 = scalar_select 0, %s9, %s7
  $region1: #{tpu_custom_call.1} parent=0
    #allocation2 [shape = 'u8[4096]{0}', space=vmem, size = 0x1000, scoped, tag = 'input window, operand 0, single buffered']
    #allocation3 [shape = 's32[1]{0}', space=sflag, size = 0x4, scoped, tag = 'scoped memory for tpu_custom_call.1']
    #allocation4 [shape = 's32[1]{0}', space=sflag, size = 0x4, scoped, tag = 'scoped memory for tpu_custom_call.1']
    #allocation5 [shape = 'u8[2048]{0}', space=vmem, size = 0x800, scoped, tag = 'input window, operand 1, single buffered']
    #allocation6 [shape = 's32[1]{0}', space=sflag, size = 0x4, scoped, tag = 'scoped memory for tpu_custom_call.1']
    #allocation7 [shape = 'u8[4096]{0}', space=vmem, size = 0x1000, scoped, tag = 'input window, operand 2, single buffered']
    #allocation8 [shape = 'u8[4096]{0}', space=vmem, size = 0x1000, scoped, tag = 'input window, operand 4, single buffered']
    #allocation9 [shape = 's32[1]{0}', space=sflag, size = 0x4, scoped, tag = 'scoped memory for tpu_custom_call.1']
    #allocation10 [shape = 'u8[4096]{0}', space=vmem, size = 0x1000, scoped, tag = 'output window, operand 0, single buffered']
    %11 = vsyncpa [#allocation3], 0
    %12 = vsyncpa [#allocation6], 0
    %13 = vsyncpa [#allocation9], 0
    %14 = vsyncpa [#allocation4], 0
    // Predicated region
    $region2: #{tpu_custom_call.1} parent=1 // pred_check
      _
    $region3: #{tpu_custom_call.1} parent=1 // pred_check_branch
      %16 = sbr.rel (0) target = $region5
    $region4: #{tpu_custom_call.1} parent=1 // pred_region
      %s18 = ssub.s32 128, 128
      %19 = vsyncadd [#allocation3], %s18
      %s21 = sshll.u32 [#allocation2], 4
      %s22 = int_to_ptr.vmem [resolvable:$true] %s21
      %24 = dma.hbm_to_vmem [thread:$0]  %s0, 128, %s22, [#allocation3]
    $region5: #{tpu_custom_call.1} parent=1 // pred_fallthru
      _
    // Predicated region
    $region6: #{tpu_custom_call.1} parent=1 // pred_check
      _
    $region7: #{tpu_custom_call.1} parent=1 // pred_check_branch
      %26 = sbr.rel (0) target = $region9
    $region8: #{tpu_custom_call.1} parent=1 // pred_region
      %s28 = ssub.s32 64, 64
      %29 = vsyncadd [#allocation6], %s28
      %s31 = sshll.u32 [#allocation5], 4
      %s32 = int_to_ptr.vmem [resolvable:$true] %s31
      %34 = dma.hbm_to_vmem [thread:$0]  %s1, 64, %s32, [#allocation6]
    $region9: #{tpu_custom_call.1} parent=1 // pred_fallthru
      _
    // Predicated region
    $region10: #{tpu_custom_call.1} parent=1 // pred_check
      _
    $region11: #{tpu_custom_call.1} parent=1 // pred_check_branch
      %36 = sbr.rel (0) target = $region13
    $region12: #{tpu_custom_call.1} parent=1 // pred_region
      %s38 = ssub.s32 128, 128
      %39 = vsyncadd [#allocation6], %s38
      %s41 = sshll.u32 [#allocation7], 4
      %s42 = int_to_ptr.vmem [resolvable:$true] %s41
      %44 = dma.hbm_to_vmem [thread:$0]  %s2, 128, %s42, [#allocation6]
    $region13: #{tpu_custom_call.1} parent=1 // pred_fallthru
      _
    // Predicated region
    $region14: #{tpu_custom_call.1} parent=1 // pred_check
      _
    $region15: #{tpu_custom_call.1} parent=1 // pred_check_branch
      %46 = sbr.rel (0) target = $region17
    $region16: #{tpu_custom_call.1} parent=1 // pred_region
      _
    $region17: #{tpu_custom_call.1} parent=1 // pred_fallthru
      _
    // Predicated region
    $region18: #{tpu_custom_call.1} parent=1 // pred_check
      _
    $region19: #{tpu_custom_call.1} parent=1 // pred_check_branch
      %48 = sbr.rel (0) target = $region21
    $region20: #{tpu_custom_call.1} parent=1 // pred_region
      %s50 = ssub.s32 128, 128
      %51 = vsyncadd [#allocation9], %s50
      %s53 = sshll.u32 [#allocation8], 4
      %s54 = int_to_ptr.vmem [resolvable:$true] %s53
      %56 = dma.hbm_to_vmem [thread:$0]  %s4, 128, %s54, [#allocation9]
    $region21: #{tpu_custom_call.1} parent=1 // pred_fallthru
      _
    // Predicated region
    $region22: #{tpu_custom_call.1} parent=1 // pred_check
      _
    $region23: #{tpu_custom_call.1} parent=1 // pred_check_branch
      %58 = sbr.rel (0) target = $region25
    $region24: #{tpu_custom_call.1} parent=1 // pred_region
      _
    $region25: #{tpu_custom_call.1} parent=1 // pred_fallthru
      _
    // Predicated region
    $region26: #{tpu_custom_call.1} parent=1 // pred_check
      _
    $region27: #{tpu_custom_call.1} parent=1 // pred_check_branch
      %60 = sbr.rel (0) target = $region29
    $region28: #{tpu_custom_call.1} parent=1 // pred_region
      %61 = dma.done [#allocation3], 128
    $region29: #{tpu_custom_call.1} parent=1 // pred_fallthru
      _
    // Predicated region
    $region30: #{tpu_custom_call.1} parent=1 // pred_check
      _
    $region31: #{tpu_custom_call.1} parent=1 // pred_check_branch
      %63 = sbr.rel (0) target = $region33
    $region32: #{tpu_custom_call.1} parent=1 // pred_region
      %64 = dma.done [#allocation6], 64
    $region33: #{tpu_custom_call.1} parent=1 // pred_fallthru
      _
    // Predicated region
    $region34: #{tpu_custom_call.1} parent=1 // pred_check
      _
    $region35: #{tpu_custom_call.1} parent=1 // pred_check_branch
      %66 = sbr.rel (0) target = $region37
    $region36: #{tpu_custom_call.1} parent=1 // pred_region
      %67 = dma.done [#allocation6], 128
    $region37: #{tpu_custom_call.1} parent=1 // pred_fallthru
      _
    // Predicated region
    $region38: #{tpu_custom_call.1} parent=1 // pred_check
      _
    $region39: #{tpu_custom_call.1} parent=1 // pred_check_branch
      %69 = sbr.rel (0) target = $region41
    $region40: #{tpu_custom_call.1} parent=1 // pred_region
      %70 = dma.done [#allocation9], 128
    $region41: #{tpu_custom_call.1} parent=1 // pred_fallthru
      _
    %v71 = vld [vmem:[#allocation2] sm:$0xff]
    %v72 = vld [vmem:[#allocation5] sm:$0xf]
    %v73 = vld [vmem:[#allocation7] sm:$0xff]
    %v74 = vld [vmem:[%s3] sm:$0x1]
    %v75 = vld [vmem:[#allocation8] sm:$0xff]
    %v76 = vld [vmem:[%s5] sm:$0xf]
    %v78 = vcombine.high %v71, %v71
    %v80 = vunpack.c.l.s4 1983009808
    %v81 = vunpack.c.0.s8 %v80
    %v82 = vlaneseq
    %v83 = vshrl.u32 %v82, 7
    %v84 = vsub.s32 %v81, %v83
    %v85 = vrot.slane %v71, %v84
    %v87 = vunpack.c.l.s4 1983009808
    %v88 = vunpack.c.0.s8 %v87
    %v89 = vlaneseq
    %v90 = vshrl.u32 %v89, 7
    %v91 = vsub.s32 %v88, %v90
    %v92 = vrot.slane %v78, %v91
    %v93 = vcombine.high %v85, %v85
    %v94 = vcombine.high %v92, %v92
    %99 = vrot.lane.b32.xlu0 %v85, 1
    %v100 = vpop.permute.xlu0 %99
    %101 = vrot.lane.b32.xlu0 %v93, 1
    %v102 = vpop.permute.xlu0 %101
    %103 = vrot.lane.b32.xlu0 %v92, 1
    %v104 = vpop.permute.xlu0 %103
    %105 = vrot.lane.b32.xlu0 %v94, 1
    %v106 = vpop.permute.xlu0 %105
    %v107 = vlaneseq
    %v108 = vand.u32 %v107, 127
    %vm109 = vcmp.lt.s32.totalorder %v108, 1
    %v110 = vsel %vm109, %v104, %v106
    %v111 = vsel %vm109, %v102, %v104
    %v112 = vsel %vm109, %v100, %v102
    %v113 = vsel %vm109, %v106, %v100
    %v114 = vlaneseq
    %v115 = vshrl.u32 %v114, 7
    %v116 = vsub.s32 0, %v115
    %v117 = vrot.slane %v72, %v116
    %v118 = vlaneseq
    %v119 = vshrl.u32 %v118, 7
    %v120 = vsub.s32 1, %v119
    %v121 = vrot.slane %v72, %v120
    %v122 = vlaneseq
    %v123 = vshrl.u32 %v122, 7
    %v124 = vsub.s32 2, %v123
    %v125 = vrot.slane %v72, %v124
    %v126 = vlaneseq
    %v127 = vshrl.u32 %v126, 7
    %v128 = vsub.s32 3, %v127
    %v129 = vrot.slane %v72, %v128
    %130 = vrot.lane.b32.xlu0 %v117, 1
    %v131 = vpop.permute.xlu0 %130
    %132 = vrot.lane.b32.xlu0 %v121, 1
    %v133 = vpop.permute.xlu0 %132
    %134 = vrot.lane.b32.xlu0 %v125, 1
    %v135 = vpop.permute.xlu0 %134
    %136 = vrot.lane.b32.xlu0 %v129, 1
    %v137 = vpop.permute.xlu0 %136
    %v138 = vsel %vm109, %v135, %v137
    %v139 = vsel %vm109, %v133, %v135
    %v140 = vsel %vm109, %v131, %v133
    %v141 = vsel %vm109, %v137, %v131
    %vm142 = vcmp.eq.s32.totalorder %v141, %v117
    %vm143 = vcmp.eq.s32.totalorder %v140, %v121
    %vm144 = vcmp.eq.s32.totalorder %v139, %v125
    %vm145 = vcmp.eq.s32.totalorder %v138, %v129
    %v146 = vsel %vm142, 1, 0
    %v147 = vsel %vm143, 1, 0
    %v148 = vsel %vm144, 1, 0
    %v149 = vsel %vm145, 1, 0
    %v150 = vlaneseq
    %v151 = vshrl.u32 %v150, 7
    %v152 = vsub.s32 0, %v151
    %v153 = vrot.slane %v146, %v152
    %v154 = vlaneseq
    %v155 = vshrl.u32 %v154, 7
    %v156 = vsub.s32 0, %v155
    %v157 = vrot.slane %v147, %v156
    %v158 = vlaneseq
    %v159 = vshrl.u32 %v158, 7
    %v160 = vsub.s32 0, %v159
    %v161 = vrot.slane %v148, %v160
    %v162 = vlaneseq
    %v163 = vshrl.u32 %v162, 7
    %v164 = vsub.s32 0, %v163
    %v165 = vrot.slane %v149, %v164
    %vm166 = vcmp.eq.s32.totalorder %v153, 1
    %vm167 = vcmp.eq.s32.totalorder %v157, 1
    %vm168 = vcmp.eq.s32.totalorder %v161, 1
    %vm169 = vcmp.eq.s32.totalorder %v165, 1
    %v170 = vsel %vm166, %v113, -inf
    %v171 = vsel %vm167, %v112, -inf
    %v172 = vsel %vm168, %v111, -inf
    %v173 = vsel %vm169, %v110, -inf
    %v178 = vcombine.low %v170, %v171
    %v179 = vcombine.low %v172, %v173
    %v181 = vunpack.c.l.s4 1983009808
    %v182 = vunpack.c.0.s8 %v181
    %v183 = vlaneseq
    %v184 = vshrl.u32 %v183, 7
    %v185 = vsub.s32 %v182, %v184
    %v186 = vrot.slane %v178, %v185
    %v188 = vunpack.c.l.s4 1983009808
    %v189 = vunpack.c.0.s8 %v188
    %v190 = vlaneseq
    %v191 = vshrl.u32 %v190, 7
    %v192 = vsub.s32 %v189, %v191
    %v193 = vrot.slane %v179, %v192
    %v194 = vcombine.low %v186, %v193
    %v196 = vmax.f32 %v71, %v194
    %v198 = vcombine.high %v196, %v196
    %v200 = vunpack.c.l.s4 1983009808
    %v201 = vunpack.c.0.s8 %v200
    %v202 = vlaneseq
    %v203 = vshrl.u32 %v202, 7
    %v204 = vsub.s32 %v201, %v203
    %v205 = vrot.slane %v196, %v204
    %v207 = vunpack.c.l.s4 1983009808
    %v208 = vunpack.c.0.s8 %v207
    %v209 = vlaneseq
    %v210 = vshrl.u32 %v209, 7
    %v211 = vsub.s32 %v208, %v210
    %v212 = vrot.slane %v198, %v211
    %v213 = vcombine.high %v205, %v205
    %v214 = vcombine.high %v212, %v212
    %219 = vrot.lane.b32.xlu0 %v205, 127
    %v220 = vpop.permute.xlu0 %219
    %221 = vrot.lane.b32.xlu0 %v213, 127
    %v222 = vpop.permute.xlu0 %221
    %223 = vrot.lane.b32.xlu0 %v212, 127
    %v224 = vpop.permute.xlu0 %223
    %225 = vrot.lane.b32.xlu0 %v214, 127
    %v226 = vpop.permute.xlu0 %225
    %vm227 = vcmp.lt.s32.totalorder %v108, 127
    %v228 = vsel %vm227, %v224, %v226
    %v229 = vsel %vm227, %v222, %v224
    %v230 = vsel %vm227, %v220, %v222
    %v231 = vsel %vm227, %v226, %v220
    %232 = vrot.lane.b32.xlu0 %v117, 127
    %v233 = vpop.permute.xlu0 %232
    %234 = vrot.lane.b32.xlu0 %v121, 127
    %v235 = vpop.permute.xlu0 %234
    %236 = vrot.lane.b32.xlu0 %v125, 127
    %v237 = vpop.permute.xlu0 %236
    %238 = vrot.lane.b32.xlu0 %v129, 127
    %v239 = vpop.permute.xlu0 %238
    %v240 = vsel %vm227, %v237, %v239
    %v241 = vsel %vm227, %v235, %v237
    %v242 = vsel %vm227, %v233, %v235
    %v243 = vsel %vm227, %v239, %v233
    %vm244 = vcmp.eq.s32.totalorder %v242, %v117
    %vm245 = vcmp.eq.s32.totalorder %v241, %v121
    %vm246 = vcmp.eq.s32.totalorder %v240, %v125
    %vm247 = vcmp.eq.s32.totalorder %v243, %v129
    %v248 = vsel %vm244, 1, 0
    %v249 = vsel %vm245, 1, 0
    %v250 = vsel %vm246, 1, 0
    %v251 = vsel %vm247, 1, 0
    %v252 = vlaneseq
    %v253 = vshrl.u32 %v252, 7
    %v254 = vsub.s32 0, %v253
    %v255 = vrot.slane %v248, %v254
    %v256 = vlaneseq
    %v257 = vshrl.u32 %v256, 7
    %v258 = vsub.s32 0, %v257
    %v259 = vrot.slane %v249, %v258
    %v260 = vlaneseq
    %v261 = vshrl.u32 %v260, 7
    %v262 = vsub.s32 0, %v261
    %v263 = vrot.slane %v250, %v262
    %v264 = vlaneseq
    %v265 = vshrl.u32 %v264, 7
    %v266 = vsub.s32 0, %v265
    %v267 = vrot.slane %v251, %v266
    %vm268 = vcmp.eq.s32.totalorder %v255, 1
    %vm269 = vcmp.eq.s32.totalorder %v259, 1
    %vm270 = vcmp.eq.s32.totalorder %v263, 1
    %vm271 = vcmp.eq.s32.totalorder %v267, 1
    %v272 = vsel %vm268, %v230, -inf
    %v273 = vsel %vm269, %v229, -inf
    %v274 = vsel %vm270, %v228, -inf
    %v275 = vsel %vm271, %v231, -inf
    %v280 = vcombine.low %v272, %v273
    %v281 = vcombine.low %v274, %v275
    %v283 = vunpack.c.l.s4 1983009808
    %v284 = vunpack.c.0.s8 %v283
    %v285 = vlaneseq
    %v286 = vshrl.u32 %v285, 7
    %v287 = vsub.s32 %v284, %v286
    %v288 = vrot.slane %v280, %v287
    %v290 = vunpack.c.l.s4 1983009808
    %v291 = vunpack.c.0.s8 %v290
    %v292 = vlaneseq
    %v293 = vshrl.u32 %v292, 7
    %v294 = vsub.s32 %v291, %v293
    %v295 = vrot.slane %v281, %v294
    %v296 = vcombine.low %v288, %v295
    %v298 = vmax.f32 %v196, %v296
    %v300 = vcombine.high %v298, %v298
    %v302 = vunpack.c.l.s4 1983009808
    %v303 = vunpack.c.0.s8 %v302
    %v304 = vlaneseq
    %v305 = vshrl.u32 %v304, 7
    %v306 = vsub.s32 %v303, %v305
    %v307 = vrot.slane %v298, %v306
    %v309 = vunpack.c.l.s4 1983009808
    %v310 = vunpack.c.0.s8 %v309
    %v311 = vlaneseq
    %v312 = vshrl.u32 %v311, 7
    %v313 = vsub.s32 %v310, %v312
    %v314 = vrot.slane %v300, %v313
    %v315 = vcombine.high %v307, %v307
    %v316 = vcombine.high %v314, %v314
    %321 = vrot.lane.b32.xlu0 %v307, 2
    %v322 = vpop.permute.xlu0 %321
    %323 = vrot.lane.b32.xlu0 %v315, 2
    %v324 = vpop.permute.xlu0 %323
    %325 = vrot.lane.b32.xlu0 %v314, 2
    %v326 = vpop.permute.xlu0 %325
    %327 = vrot.lane.b32.xlu0 %v316, 2
    %v328 = vpop.permute.xlu0 %327
    %vm329 = vcmp.lt.s32.totalorder %v108, 2
    %v330 = vsel %vm329, %v326, %v328
    %v331 = vsel %vm329, %v324, %v326
    %v332 = vsel %vm329, %v322, %v324
    %v333 = vsel %vm329, %v328, %v322
    %334 = vrot.lane.b32.xlu0 %v117, 2
    %v335 = vpop.permute.xlu0 %334
    %336 = vrot.lane.b32.xlu0 %v121, 2
    %v337 = vpop.permute.xlu0 %336
    %338 = vrot.lane.b32.xlu0 %v125, 2
    %v339 = vpop.permute.xlu0 %338
    %340 = vrot.lane.b32.xlu0 %v129, 2
    %v341 = vpop.permute.xlu0 %340
    %v342 = vsel %vm329, %v339, %v341
    %v343 = vsel %vm329, %v337, %v339
    %v344 = vsel %vm329, %v335, %v337
    %v345 = vsel %vm329, %v341, %v335
    %vm346 = vcmp.eq.s32.totalorder %v345, %v117
    %vm347 = vcmp.eq.s32.totalorder %v344, %v121
    %vm348 = vcmp.eq.s32.totalorder %v343, %v125
    %vm349 = vcmp.eq.s32.totalorder %v342, %v129
    %v350 = vsel %vm346, 1, 0
    %v351 = vsel %vm347, 1, 0
    %v352 = vsel %vm348, 1, 0
    %v353 = vsel %vm349, 1, 0
    %v354 = vlaneseq
    %v355 = vshrl.u32 %v354, 7
    %v356 = vsub.s32 0, %v355
    %v357 = vrot.slane %v350, %v356
    %v358 = vlaneseq
    %v359 = vshrl.u32 %v358, 7
    %v360 = vsub.s32 0, %v359
    %v361 = vrot.slane %v351, %v360
    %v362 = vlaneseq
    %v363 = vshrl.u32 %v362, 7
    %v364 = vsub.s32 0, %v363
    %v365 = vrot.slane %v352, %v364
    %v366 = vlaneseq
    %v367 = vshrl.u32 %v366, 7
    %v368 = vsub.s32 0, %v367
    %v369 = vrot.slane %v353, %v368
    %vm370 = vcmp.eq.s32.totalorder %v357, 1
    %vm371 = vcmp.eq.s32.totalorder %v361, 1
    %vm372 = vcmp.eq.s32.totalorder %v365, 1
    %vm373 = vcmp.eq.s32.totalorder %v369, 1
    %v374 = vsel %vm370, %v333, -inf
    %v375 = vsel %vm371, %v332, -inf
    %v376 = vsel %vm372, %v331, -inf
    %v377 = vsel %vm373, %v330, -inf
    %v382 = vcombine.low %v374, %v375
    %v383 = vcombine.low %v376, %v377
    %v385 = vunpack.c.l.s4 1983009808
    %v386 = vunpack.c.0.s8 %v385
    %v387 = vlaneseq
    %v388 = vshrl.u32 %v387, 7
    %v389 = vsub.s32 %v386, %v388
    %v390 = vrot.slane %v382, %v389
    %v392 = vunpack.c.l.s4 1983009808
    %v393 = vunpack.c.0.s8 %v392
    %v394 = vlaneseq
    %v395 = vshrl.u32 %v394, 7
    %v396 = vsub.s32 %v393, %v395
    %v397 = vrot.slane %v383, %v396
    %v398 = vcombine.low %v390, %v397
    %v400 = vmax.f32 %v298, %v398
    %v402 = vcombine.high %v400, %v400
    %v404 = vunpack.c.l.s4 1983009808
    %v405 = vunpack.c.0.s8 %v404
    %v406 = vlaneseq
    %v407 = vshrl.u32 %v406, 7
    %v408 = vsub.s32 %v405, %v407
    %v409 = vrot.slane %v400, %v408
    %v411 = vunpack.c.l.s4 1983009808
    %v412 = vunpack.c.0.s8 %v411
    %v413 = vlaneseq
    %v414 = vshrl.u32 %v413, 7
    %v415 = vsub.s32 %v412, %v414
    %v416 = vrot.slane %v402, %v415
    %v417 = vcombine.high %v409, %v409
    %v418 = vcombine.high %v416, %v416
    %423 = vrot.lane.b32.xlu0 %v409, 126
    %v424 = vpop.permute.xlu0 %423
    %425 = vrot.lane.b32.xlu0 %v417, 126
    %v426 = vpop.permute.xlu0 %425
    %427 = vrot.lane.b32.xlu0 %v416, 126
    %v428 = vpop.permute.xlu0 %427
    %429 = vrot.lane.b32.xlu0 %v418, 126
    %v430 = vpop.permute.xlu0 %429
    %vm431 = vcmp.lt.s32.totalorder %v108, 126
    %v432 = vsel %vm431, %v428, %v430
    %v433 = vsel %vm431, %v426, %v428
    %v434 = vsel %vm431, %v424, %v426
    %v435 = vsel %vm431, %v430, %v424
    %436 = vrot.lane.b32.xlu0 %v117, 126
    %v437 = vpop.permute.xlu0 %436
    %438 = vrot.lane.b32.xlu0 %v121, 126
    %v439 = vpop.permute.xlu0 %438
    %440 = vrot.lane.b32.xlu0 %v125, 126
    %v441 = vpop.permute.xlu0 %440
    %442 = vrot.lane.b32.xlu0 %v129, 126
    %v443 = vpop.permute.xlu0 %442
    %v444 = vsel %vm431, %v441, %v443
    %v445 = vsel %vm431, %v439, %v441
    %v446 = vsel %vm431, %v437, %v439
    %v447 = vsel %vm431, %v443, %v437
    %vm448 = vcmp.eq.s32.totalorder %v446, %v117
    %vm449 = vcmp.eq.s32.totalorder %v445, %v121
    %vm450 = vcmp.eq.s32.totalorder %v444, %v125
    %vm451 = vcmp.eq.s32.totalorder %v447, %v129
    %v452 = vsel %vm448, 1, 0
    %v453 = vsel %vm449, 1, 0
    %v454 = vsel %vm450, 1, 0
    %v455 = vsel %vm451, 1, 0
    %v456 = vlaneseq
    %v457 = vshrl.u32 %v456, 7
    %v458 = vsub.s32 0, %v457
    %v459 = vrot.slane %v452, %v458
    %v460 = vlaneseq
    %v461 = vshrl.u32 %v460, 7
    %v462 = vsub.s32 0, %v461
    %v463 = vrot.slane %v453, %v462
    %v464 = vlaneseq
    %v465 = vshrl.u32 %v464, 7
    %v466 = vsub.s32 0, %v465
    %v467 = vrot.slane %v454, %v466
    %v468 = vlaneseq
    %v469 = vshrl.u32 %v468, 7
    %v470 = vsub.s32 0, %v469
    %v471 = vrot.slane %v455, %v470
    %vm472 = vcmp.eq.s32.totalorder %v459, 1
    %vm473 = vcmp.eq.s32.totalorder %v463, 1
    %vm474 = vcmp.eq.s32.totalorder %v467, 1
    %vm475 = vcmp.eq.s32.totalorder %v471, 1
    %v476 = vsel %vm472, %v434, -inf
    %v477 = vsel %vm473, %v433, -inf
    %v478 = vsel %vm474, %v432, -inf
    %v479 = vsel %vm475, %v435, -inf
    %v484 = vcombine.low %v476, %v477
    %v485 = vcombine.low %v478, %v479
    %v487 = vunpack.c.l.s4 1983009808
    %v488 = vunpack.c.0.s8 %v487
    %v489 = vlaneseq
    %v490 = vshrl.u32 %v489, 7
    %v491 = vsub.s32 %v488, %v490
    %v492 = vrot.slane %v484, %v491
    %v494 = vunpack.c.l.s4 1983009808
    %v495 = vunpack.c.0.s8 %v494
    %v496 = vlaneseq
    %v497 = vshrl.u32 %v496, 7
    %v498 = vsub.s32 %v495, %v497
    %v499 = vrot.slane %v485, %v498
    %v500 = vcombine.low %v492, %v499
    %v502 = vmax.f32 %v400, %v500
    %v504 = vcombine.high %v502, %v502
    %v506 = vunpack.c.l.s4 1983009808
    %v507 = vunpack.c.0.s8 %v506
    %v508 = vlaneseq
    %v509 = vshrl.u32 %v508, 7
    %v510 = vsub.s32 %v507, %v509
    %v511 = vrot.slane %v502, %v510
    %v513 = vunpack.c.l.s4 1983009808
    %v514 = vunpack.c.0.s8 %v513
    %v515 = vlaneseq
    %v516 = vshrl.u32 %v515, 7
    %v517 = vsub.s32 %v514, %v516
    %v518 = vrot.slane %v504, %v517
    %v519 = vcombine.high %v511, %v511
    %v520 = vcombine.high %v518, %v518
    %525 = vrot.lane.b32.xlu0 %v511, 4
    %v526 = vpop.permute.xlu0 %525
    %527 = vrot.lane.b32.xlu0 %v519, 4
    %v528 = vpop.permute.xlu0 %527
    %529 = vrot.lane.b32.xlu0 %v518, 4
    %v530 = vpop.permute.xlu0 %529
    %531 = vrot.lane.b32.xlu0 %v520, 4
    %v532 = vpop.permute.xlu0 %531
    %vm533 = vcmp.lt.s32.totalorder %v108, 4
    %v534 = vsel %vm533, %v530, %v532
    %v535 = vsel %vm533, %v528, %v530
    %v536 = vsel %vm533, %v526, %v528
    %v537 = vsel %vm533, %v532, %v526
    %538 = vrot.lane.b32.xlu0 %v117, 4
    %v539 = vpop.permute.xlu0 %538
    %540 = vrot.lane.b32.xlu0 %v121, 4
    %v541 = vpop.permute.xlu0 %540
    %542 = vrot.lane.b32.xlu0 %v125, 4
    %v543 = vpop.permute.xlu0 %542
    %544 = vrot.lane.b32.xlu0 %v129, 4
    %v545 = vpop.permute.xlu0 %544
    %v546 = vsel %vm533, %v543, %v545
    %v547 = vsel %vm533, %v541, %v543
    %v548 = vsel %vm533, %v539, %v541
    %v549 = vsel %vm533, %v545, %v539
    %vm550 = vcmp.eq.s32.totalorder %v549, %v117
    %vm551 = vcmp.eq.s32.totalorder %v548, %v121
    %vm552 = vcmp.eq.s32.totalorder %v547, %v125
    %vm553 = vcmp.eq.s32.totalorder %v546, %v129
    %v554 = vsel %vm550, 1, 0
    %v555 = vsel %vm551, 1, 0
    %v556 = vsel %vm552, 1, 0
    %v557 = vsel %vm553, 1, 0
    %v558 = vlaneseq
    %v559 = vshrl.u32 %v558, 7
    %v560 = vsub.s32 0, %v559
    %v561 = vrot.slane %v554, %v560
    %v562 = vlaneseq
    %v563 = vshrl.u32 %v562, 7
    %v564 = vsub.s32 0, %v563
    %v565 = vrot.slane %v555, %v564
    %v566 = vlaneseq
    %v567 = vshrl.u32 %v566, 7
    %v568 = vsub.s32 0, %v567
    %v569 = vrot.slane %v556, %v568
    %v570 = vlaneseq
    %v571 = vshrl.u32 %v570, 7
    %v572 = vsub.s32 0, %v571
    %v573 = vrot.slane %v557, %v572
    %vm574 = vcmp.eq.s32.totalorder %v561, 1
    %vm575 = vcmp.eq.s32.totalorder %v565, 1
    %vm576 = vcmp.eq.s32.totalorder %v569, 1
    %vm577 = vcmp.eq.s32.totalorder %v573, 1
    %v578 = vsel %vm574, %v537, -inf
    %v579 = vsel %vm575, %v536, -inf
    %v580 = vsel %vm576, %v535, -inf
    %v581 = vsel %vm577, %v534, -inf
    %v586 = vcombine.low %v578, %v579
    %v587 = vcombine.low %v580, %v581
    %v589 = vunpack.c.l.s4 1983009808
    %v590 = vunpack.c.0.s8 %v589
    %v591 = vlaneseq
    %v592 = vshrl.u32 %v591, 7
    %v593 = vsub.s32 %v590, %v592
    %v594 = vrot.slane %v586, %v593
    %v596 = vunpack.c.l.s4 1983009808
    %v597 = vunpack.c.0.s8 %v596
    %v598 = vlaneseq
    %v599 = vshrl.u32 %v598, 7
    %v600 = vsub.s32 %v597, %v599
    %v601 = vrot.slane %v587, %v600
    %v602 = vcombine.low %v594, %v601
    %v604 = vmax.f32 %v502, %v602
    %v606 = vcombine.high %v604, %v604
    %v608 = vunpack.c.l.s4 1983009808
    %v609 = vunpack.c.0.s8 %v608
    %v610 = vlaneseq
    %v611 = vshrl.u32 %v610, 7
    %v612 = vsub.s32 %v609, %v611
    %v613 = vrot.slane %v604, %v612
    %v615 = vunpack.c.l.s4 1983009808
    %v616 = vunpack.c.0.s8 %v615
    %v617 = vlaneseq
    %v618 = vshrl.u32 %v617, 7
    %v619 = vsub.s32 %v616, %v618
    %v620 = vrot.slane %v606, %v619
    %v621 = vcombine.high %v613, %v613
    %v622 = vcombine.high %v620, %v620
    %627 = vrot.lane.b32.xlu0 %v613, 124
    %v628 = vpop.permute.xlu0 %627
    %629 = vrot.lane.b32.xlu0 %v621, 124
    %v630 = vpop.permute.xlu0 %629
    %631 = vrot.lane.b32.xlu0 %v620, 124
    %v632 = vpop.permute.xlu0 %631
    %633 = vrot.lane.b32.xlu0 %v622, 124
    %v634 = vpop.permute.xlu0 %633
    %vm635 = vcmp.lt.s32.totalorder %v108, 124
    %v636 = vsel %vm635, %v632, %v634
    %v637 = vsel %vm635, %v630, %v632
    %v638 = vsel %vm635, %v628, %v630
    %v639 = vsel %vm635, %v634, %v628
    %640 = vrot.lane.b32.xlu0 %v117, 124
    %v641 = vpop.permute.xlu0 %640
    %642 = vrot.lane.b32.xlu0 %v121, 124
    %v643 = vpop.permute.xlu0 %642
    %644 = vrot.lane.b32.xlu0 %v125, 124
    %v645 = vpop.permute.xlu0 %644
    %646 = vrot.lane.b32.xlu0 %v129, 124
    %v647 = vpop.permute.xlu0 %646
    %v648 = vsel %vm635, %v645, %v647
    %v649 = vsel %vm635, %v643, %v645
    %v650 = vsel %vm635, %v641, %v643
    %v651 = vsel %vm635, %v647, %v641
    %vm652 = vcmp.eq.s32.totalorder %v650, %v117
    %vm653 = vcmp.eq.s32.totalorder %v649, %v121
    %vm654 = vcmp.eq.s32.totalorder %v648, %v125
    %vm655 = vcmp.eq.s32.totalorder %v651, %v129
    %v656 = vsel %vm652, 1, 0
    %v657 = vsel %vm653, 1, 0
    %v658 = vsel %vm654, 1, 0
    %v659 = vsel %vm655, 1, 0
    %v660 = vlaneseq
    %v661 = vshrl.u32 %v660, 7
    %v662 = vsub.s32 0, %v661
    %v663 = vrot.slane %v656, %v662
    %v664 = vlaneseq
    %v665 = vshrl.u32 %v664, 7
    %v666 = vsub.s32 0, %v665
    %v667 = vrot.slane %v657, %v666
    %v668 = vlaneseq
    %v669 = vshrl.u32 %v668, 7
    %v670 = vsub.s32 0, %v669
    %v671 = vrot.slane %v658, %v670
    %v672 = vlaneseq
    %v673 = vshrl.u32 %v672, 7
    %v674 = vsub.s32 0, %v673
    %v675 = vrot.slane %v659, %v674
    %vm676 = vcmp.eq.s32.totalorder %v663, 1
    %vm677 = vcmp.eq.s32.totalorder %v667, 1
    %vm678 = vcmp.eq.s32.totalorder %v671, 1
    %vm679 = vcmp.eq.s32.totalorder %v675, 1
    %v680 = vsel %vm676, %v638, -inf
    %v681 = vsel %vm677, %v637, -inf
    %v682 = vsel %vm678, %v636, -inf
    %v683 = vsel %vm679, %v639, -inf
    %v688 = vcombine.low %v680, %v681
    %v689 = vcombine.low %v682, %v683
    %v691 = vunpack.c.l.s4 1983009808
    %v692 = vunpack.c.0.s8 %v691
    %v693 = vlaneseq
    %v694 = vshrl.u32 %v693, 7
    %v695 = vsub.s32 %v692, %v694
    %v696 = vrot.slane %v688, %v695
    %v698 = vunpack.c.l.s4 1983009808
    %v699 = vunpack.c.0.s8 %v698
    %v700 = vlaneseq
    %v701 = vshrl.u32 %v700, 7
    %v702 = vsub.s32 %v699, %v701
    %v703 = vrot.slane %v689, %v702
    %v704 = vcombine.low %v696, %v703
    %v706 = vmax.f32 %v604, %v704
    %v708 = vcombine.high %v706, %v706
    %v710 = vunpack.c.l.s4 1983009808
    %v711 = vunpack.c.0.s8 %v710
    %v712 = vlaneseq
    %v713 = vshrl.u32 %v712, 7
    %v714 = vsub.s32 %v711, %v713
    %v715 = vrot.slane %v706, %v714
    %v717 = vunpack.c.l.s4 1983009808
    %v718 = vunpack.c.0.s8 %v717
    %v719 = vlaneseq
    %v720 = vshrl.u32 %v719, 7
    %v721 = vsub.s32 %v718, %v720
    %v722 = vrot.slane %v708, %v721
    %v723 = vcombine.high %v715, %v715
    %v724 = vcombine.high %v722, %v722
    %729 = vrot.lane.b32.xlu0 %v715, 8
    %v730 = vpop.permute.xlu0 %729
    %731 = vrot.lane.b32.xlu0 %v723, 8
    %v732 = vpop.permute.xlu0 %731
    %733 = vrot.lane.b32.xlu0 %v722, 8
    %v734 = vpop.permute.xlu0 %733
    %735 = vrot.lane.b32.xlu0 %v724, 8
    %v736 = vpop.permute.xlu0 %735
    %vm737 = vcmp.lt.s32.totalorder %v108, 8
    %v738 = vsel %vm737, %v734, %v736
    %v739 = vsel %vm737, %v732, %v734
    %v740 = vsel %vm737, %v730, %v732
    %v741 = vsel %vm737, %v736, %v730
    %742 = vrot.lane.b32.xlu0 %v117, 8
    %v743 = vpop.permute.xlu0 %742
    %744 = vrot.lane.b32.xlu0 %v121, 8
    %v745 = vpop.permute.xlu0 %744
    %746 = vrot.lane.b32.xlu0 %v125, 8
    %v747 = vpop.permute.xlu0 %746
    %748 = vrot.lane.b32.xlu0 %v129, 8
    %v749 = vpop.permute.xlu0 %748
    %v750 = vsel %vm737, %v747, %v749
    %v751 = vsel %vm737, %v745, %v747
    %v752 = vsel %vm737, %v743, %v745
    %v753 = vsel %vm737, %v749, %v743
    %vm754 = vcmp.eq.s32.totalorder %v753, %v117
    %vm755 = vcmp.eq.s32.totalorder %v752, %v121
    %vm756 = vcmp.eq.s32.totalorder %v751, %v125
    %vm757 = vcmp.eq.s32.totalorder %v750, %v129
    %v758 = vsel %vm754, 1, 0
    %v759 = vsel %vm755, 1, 0
    %v760 = vsel %vm756, 1, 0
    %v761 = vsel %vm757, 1, 0
    %v762 = vlaneseq
    %v763 = vshrl.u32 %v762, 7
    %v764 = vsub.s32 0, %v763
    %v765 = vrot.slane %v758, %v764
    %v766 = vlaneseq
    %v767 = vshrl.u32 %v766, 7
    %v768 = vsub.s32 0, %v767
    %v769 = vrot.slane %v759, %v768
    %v770 = vlaneseq
    %v771 = vshrl.u32 %v770, 7
    %v772 = vsub.s32 0, %v771
    %v773 = vrot.slane %v760, %v772
    %v774 = vlaneseq
    %v775 = vshrl.u32 %v774, 7
    %v776 = vsub.s32 0, %v775
    %v777 = vrot.slane %v761, %v776
    %vm778 = vcmp.eq.s32.totalorder %v765, 1
    %vm779 = vcmp.eq.s32.totalorder %v769, 1
    %vm780 = vcmp.eq.s32.totalorder %v773, 1
    %vm781 = vcmp.eq.s32.totalorder %v777, 1
    %v782 = vsel %vm778, %v741, -inf
    %v783 = vsel %vm779, %v740, -inf
    %v784 = vsel %vm780, %v739, -inf
    %v785 = vsel %vm781, %v738, -inf
    %v790 = vcombine.low %v782, %v783
    %v791 = vcombine.low %v784, %v785
    %v793 = vunpack.c.l.s4 1983009808
    %v794 = vunpack.c.0.s8 %v793
    %v795 = vlaneseq
    %v796 = vshrl.u32 %v795, 7
    %v797 = vsub.s32 %v794, %v796
    %v798 = vrot.slane %v790, %v797
    %v800 = vunpack.c.l.s4 1983009808
    %v801 = vunpack.c.0.s8 %v800
    %v802 = vlaneseq
    %v803 = vshrl.u32 %v802, 7
    %v804 = vsub.s32 %v801, %v803
    %v805 = vrot.slane %v791, %v804
    %v806 = vcombine.low %v798, %v805
    %v808 = vmax.f32 %v706, %v806
    %v810 = vcombine.high %v808, %v808
    %v812 = vunpack.c.l.s4 1983009808
    %v813 = vunpack.c.0.s8 %v812
    %v814 = vlaneseq
    %v815 = vshrl.u32 %v814, 7
    %v816 = vsub.s32 %v813, %v815
    %v817 = vrot.slane %v808, %v816
    %v819 = vunpack.c.l.s4 1983009808
    %v820 = vunpack.c.0.s8 %v819
    %v821 = vlaneseq
    %v822 = vshrl.u32 %v821, 7
    %v823 = vsub.s32 %v820, %v822
    %v824 = vrot.slane %v810, %v823
    %v825 = vcombine.high %v817, %v817
    %v826 = vcombine.high %v824, %v824
    %831 = vrot.lane.b32.xlu0 %v817, 120
    %v832 = vpop.permute.xlu0 %831
    %833 = vrot.lane.b32.xlu0 %v825, 120
    %v834 = vpop.permute.xlu0 %833
    %835 = vrot.lane.b32.xlu0 %v824, 120
    %v836 = vpop.permute.xlu0 %835
    %837 = vrot.lane.b32.xlu0 %v826, 120
    %v838 = vpop.permute.xlu0 %837
    %vm839 = vcmp.lt.s32.totalorder %v108, 120
    %v840 = vsel %vm839, %v836, %v838
    %v841 = vsel %vm839, %v834, %v836
    %v842 = vsel %vm839, %v832, %v834
    %v843 = vsel %vm839, %v838, %v832
    %844 = vrot.lane.b32.xlu0 %v117, 120
    %v845 = vpop.permute.xlu0 %844
    %846 = vrot.lane.b32.xlu0 %v121, 120
    %v847 = vpop.permute.xlu0 %846
    %848 = vrot.lane.b32.xlu0 %v125, 120
    %v849 = vpop.permute.xlu0 %848
    %850 = vrot.lane.b32.xlu0 %v129, 120
    %v851 = vpop.permute.xlu0 %850
    %v852 = vsel %vm839, %v849, %v851
    %v853 = vsel %vm839, %v847, %v849
    %v854 = vsel %vm839, %v845, %v847
    %v855 = vsel %vm839, %v851, %v845
    %vm856 = vcmp.eq.s32.totalorder %v854, %v117
    %vm857 = vcmp.eq.s32.totalorder %v853, %v121
    %vm858 = vcmp.eq.s32.totalorder %v852, %v125
    %vm859 = vcmp.eq.s32.totalorder %v855, %v129
    %v860 = vsel %vm856, 1, 0
    %v861 = vsel %vm857, 1, 0
    %v862 = vsel %vm858, 1, 0
    %v863 = vsel %vm859, 1, 0
    %v864 = vlaneseq
    %v865 = vshrl.u32 %v864, 7
    %v866 = vsub.s32 0, %v865
    %v867 = vrot.slane %v860, %v866
    %v868 = vlaneseq
    %v869 = vshrl.u32 %v868, 7
    %v870 = vsub.s32 0, %v869
    %v871 = vrot.slane %v861, %v870
    %v872 = vlaneseq
    %v873 = vshrl.u32 %v872, 7
    %v874 = vsub.s32 0, %v873
    %v875 = vrot.slane %v862, %v874
    %v876 = vlaneseq
    %v877 = vshrl.u32 %v876, 7
    %v878 = vsub.s32 0, %v877
    %v879 = vrot.slane %v863, %v878
    %vm880 = vcmp.eq.s32.totalorder %v867, 1
    %vm881 = vcmp.eq.s32.totalorder %v871, 1
    %vm882 = vcmp.eq.s32.totalorder %v875, 1
    %vm883 = vcmp.eq.s32.totalorder %v879, 1
    %v884 = vsel %vm880, %v842, -inf
    %v885 = vsel %vm881, %v841, -inf
    %v886 = vsel %vm882, %v840, -inf
    %v887 = vsel %vm883, %v843, -inf
    %v892 = vcombine.low %v884, %v885
    %v893 = vcombine.low %v886, %v887
    %v895 = vunpack.c.l.s4 1983009808
    %v896 = vunpack.c.0.s8 %v895
    %v897 = vlaneseq
    %v898 = vshrl.u32 %v897, 7
    %v899 = vsub.s32 %v896, %v898
    %v900 = vrot.slane %v892, %v899
    %v902 = vunpack.c.l.s4 1983009808
    %v903 = vunpack.c.0.s8 %v902
    %v904 = vlaneseq
    %v905 = vshrl.u32 %v904, 7
    %v906 = vsub.s32 %v903, %v905
    %v907 = vrot.slane %v893, %v906
    %v908 = vcombine.low %v900, %v907
    %v910 = vmax.f32 %v808, %v908
    %v912 = vlaneseq
    %v913 = vshrl.u32 %v912, 7
    %v914 = vsub.s32 0, %v913
    %v915 = vrot.slane %v73, %v914
    %v916 = vlaneseq
    %v917 = vshrl.u32 %v916, 7
    %v918 = vsub.s32 2, %v917
    %v919 = vrot.slane %v73, %v918
    %v920 = vlaneseq
    %v921 = vshrl.u32 %v920, 7
    %v922 = vsub.s32 4, %v921
    %v923 = vrot.slane %v73, %v922
    %v924 = vlaneseq
    %v925 = vshrl.u32 %v924, 7
    %v926 = vsub.s32 6, %v925
    %v927 = vrot.slane %v73, %v926
    %v932 = vlaneseq
    %v933 = vshrl.u32 %v932, 7
    %v934 = vsub.s32 0, %v933
    %v935 = vrot.slane %v915, %v934
    %v936 = vlaneseq
    %v937 = vshrl.u32 %v936, 7
    %v938 = vsub.s32 0, %v937
    %v939 = vrot.slane %v919, %v938
    %v940 = vlaneseq
    %v941 = vshrl.u32 %v940, 7
    %v942 = vsub.s32 0, %v941
    %v943 = vrot.slane %v923, %v942
    %v944 = vlaneseq
    %v945 = vshrl.u32 %v944, 7
    %v946 = vsub.s32 0, %v945
    %v947 = vrot.slane %v927, %v946
    %v952 = vcombine.low %v935, %v939
    %v953 = vcombine.low %v943, %v947
    %v955 = vunpack.c.l.s4 1983009808
    %v956 = vunpack.c.0.s8 %v955
    %v957 = vlaneseq
    %v958 = vshrl.u32 %v957, 7
    %v959 = vsub.s32 %v956, %v958
    %v960 = vrot.slane %v952, %v959
    %v962 = vunpack.c.l.s4 1983009808
    %v963 = vunpack.c.0.s8 %v962
    %v964 = vlaneseq
    %v965 = vshrl.u32 %v964, 7
    %v966 = vsub.s32 %v963, %v965
    %v967 = vrot.slane %v953, %v966
    %v968 = vcombine.low %v960, %v967
    %v970 = vmul.f32 %v71, %v968
    %v972 = vcombine.high %v970, %v970
    %v974 = vunpack.c.l.s4 1983009808
    %v975 = vunpack.c.0.s8 %v974
    %v976 = vlaneseq
    %v977 = vshrl.u32 %v976, 7
    %v978 = vsub.s32 %v975, %v977
    %v979 = vrot.slane %v970, %v978
    %v981 = vunpack.c.l.s4 1983009808
    %v982 = vunpack.c.0.s8 %v981
    %v983 = vlaneseq
    %v984 = vshrl.u32 %v983, 7
    %v985 = vsub.s32 %v982, %v984
    %v986 = vrot.slane %v972, %v985
    %v987 = vcombine.high %v979, %v979
    %v988 = vcombine.high %v986, %v986
    %vm993 = vcmask 1041408
    %v994 = vsel %vm993, %v979, 0.0
    %v995 = vsel %vm993, %v987, 0.0
    %v996 = vadd.f32 %v994, %v995
    %v997 = vsel %vm993, %v986, 0.0
    %v998 = vadd.f32 %v996, %v997
    %v999 = vsel %vm993, %v988, 0.0
    %v1000 = vadd.f32 %v998, %v999
    %1001 = vadd.xlane.f32.xlu0 %v1000
    %v1002 = vpop.xlane.xlu0 %1001
    %v1003 = vmul.f32 %v910, %v968
    %v1005 = vcombine.high %v1003, %v1003
    %v1007 = vunpack.c.l.s4 1983009808
    %v1008 = vunpack.c.0.s8 %v1007
    %v1009 = vlaneseq
    %v1010 = vshrl.u32 %v1009, 7
    %v1011 = vsub.s32 %v1008, %v1010
    %v1012 = vrot.slane %v1003, %v1011
    %v1014 = vunpack.c.l.s4 1983009808
    %v1015 = vunpack.c.0.s8 %v1014
    %v1016 = vlaneseq
    %v1017 = vshrl.u32 %v1016, 7
    %v1018 = vsub.s32 %v1015, %v1017
    %v1019 = vrot.slane %v1005, %v1018
    %v1020 = vcombine.high %v1012, %v1012
    %v1021 = vcombine.high %v1019, %v1019
    %v1026 = vsel %vm993, %v1012, 0.0
    %v1027 = vsel %vm993, %v1020, 0.0
    %v1028 = vadd.f32 %v1026, %v1027
    %v1029 = vsel %vm993, %v1019, 0.0
    %v1030 = vadd.f32 %v1028, %v1029
    %v1031 = vsel %vm993, %v1021, 0.0
    %v1032 = vadd.f32 %v1030, %v1031
    %1033 = vadd.xlane.f32.xlu0 %v1032
    %v1034 = vpop.xlane.xlu0 %1033
    %v1036 = vlaneseq
    %v1037 = vshrl.u32 %v1036, 7
    %v1038 = vsub.s32 0, %v1037
    %v1039 = vrot.slane %v74, %v1038
    %v1041 = vadd.f32 %v1002, %v1039
    %v1042 = vmax.f32 %v1041, 0.0
    %v1043 = vadd.f32 %v1034, %v1039
    %v1044 = vmax.f32 %v1043, 0.0
    %v1045 = vadd.f32 %v1042, %v1044
    %1047 = vset.pattern.permute.xlu0 0
    %1048 = vperm.xlu0 %1047, %v1045
    %v1049 = vpop.permute.xlu0 %1048
    %v1052 = vlaneseq
    %v1053 = vshrl.u32 %v1052, 7
    %v1054 = vsub.s32 0, %v1053
    %v1055 = vrot.slane %v75, %v1054
    %v1056 = vlaneseq
    %v1057 = vshrl.u32 %v1056, 7
    %v1058 = vsub.s32 2, %v1057
    %v1059 = vrot.slane %v75, %v1058
    %v1060 = vlaneseq
    %v1061 = vshrl.u32 %v1060, 7
    %v1062 = vsub.s32 4, %v1061
    %v1063 = vrot.slane %v75, %v1062
    %v1064 = vlaneseq
    %v1065 = vshrl.u32 %v1064, 7
    %v1066 = vsub.s32 6, %v1065
    %v1067 = vrot.slane %v75, %v1066
    %v1072 = vlaneseq
    %v1073 = vshrl.u32 %v1072, 7
    %v1074 = vsub.s32 0, %v1073
    %v1075 = vrot.slane %v1055, %v1074
    %v1076 = vlaneseq
    %v1077 = vshrl.u32 %v1076, 7
    %v1078 = vsub.s32 0, %v1077
    %v1079 = vrot.slane %v1059, %v1078
    %v1080 = vlaneseq
    %v1081 = vshrl.u32 %v1080, 7
    %v1082 = vsub.s32 0, %v1081
    %v1083 = vrot.slane %v1063, %v1082
    %v1084 = vlaneseq
    %v1085 = vshrl.u32 %v1084, 7
    %v1086 = vsub.s32 0, %v1085
    %v1087 = vrot.slane %v1067, %v1086
    %v1088 = vmul.f32 %v1049, %v1075
    %v1089 = vmul.f32 %v1049, %v1079
    %v1090 = vmul.f32 %v1049, %v1083
    %v1091 = vmul.f32 %v1049, %v1087
    %v1093 = vlaneseq
    %v1094 = vshrl.u32 %v1093, 7
    %v1095 = vsub.s32 0, %v1094
    %v1096 = vrot.slane %v76, %v1095
    %v1097 = vlaneseq
    %v1098 = vshrl.u32 %v1097, 7
    %v1099 = vsub.s32 1, %v1098
    %v1100 = vrot.slane %v76, %v1099
    %v1101 = vlaneseq
    %v1102 = vshrl.u32 %v1101, 7
    %v1103 = vsub.s32 2, %v1102
    %v1104 = vrot.slane %v76, %v1103
    %v1105 = vlaneseq
    %v1106 = vshrl.u32 %v1105, 7
    %v1107 = vsub.s32 3, %v1106
    %v1108 = vrot.slane %v76, %v1107
    %v1113 = vadd.f32 %v1096, %v1088
    %v1114 = vadd.f32 %v1100, %v1089
    %v1115 = vadd.f32 %v1104, %v1090
    %v1116 = vadd.f32 %v1108, %v1091
    %v1117 = vlaneseq
    %v1118 = vshrl.u32 %v1117, 7
    %v1119 = vsub.s32 1, %v1118
    %v1120 = vrot.slane %v73, %v1119
    %v1121 = vlaneseq
    %v1122 = vshrl.u32 %v1121, 7
    %v1123 = vsub.s32 3, %v1122
    %v1124 = vrot.slane %v73, %v1123
    %v1125 = vlaneseq
    %v1126 = vshrl.u32 %v1125, 7
    %v1127 = vsub.s32 5, %v1126
    %v1128 = vrot.slane %v73, %v1127
    %v1129 = vlaneseq
    %v1130 = vshrl.u32 %v1129, 7
    %v1131 = vsub.s32 7, %v1130
    %v1132 = vrot.slane %v73, %v1131
    %v1137 = vlaneseq
    %v1138 = vshrl.u32 %v1137, 7
    %v1139 = vsub.s32 1, %v1138
    %v1140 = vrot.slane %v1120, %v1139
    %v1141 = vlaneseq
    %v1142 = vshrl.u32 %v1141, 7
    %v1143 = vsub.s32 1, %v1142
    %v1144 = vrot.slane %v1124, %v1143
    %v1145 = vlaneseq
    %v1146 = vshrl.u32 %v1145, 7
    %v1147 = vsub.s32 1, %v1146
    %v1148 = vrot.slane %v1128, %v1147
    %v1149 = vlaneseq
    %v1150 = vshrl.u32 %v1149, 7
    %v1151 = vsub.s32 1, %v1150
    %v1152 = vrot.slane %v1132, %v1151
    %v1157 = vcombine.low %v1140, %v1144
    %v1158 = vcombine.low %v1148, %v1152
    %v1160 = vunpack.c.l.s4 1983009808
    %v1161 = vunpack.c.0.s8 %v1160
    %v1162 = vlaneseq
    %v1163 = vshrl.u32 %v1162, 7
    %v1164 = vsub.s32 %v1161, %v1163
    %v1165 = vrot.slane %v1157, %v1164
    %v1167 = vunpack.c.l.s4 1983009808
    %v1168 = vunpack.c.0.s8 %v1167
    %v1169 = vlaneseq
    %v1170 = vshrl.u32 %v1169, 7
    %v1171 = vsub.s32 %v1168, %v1170
    %v1172 = vrot.slane %v1158, %v1171
    %v1173 = vcombine.low %v1165, %v1172
    %v1175 = vmul.f32 %v71, %v1173
    %v1177 = vcombine.high %v1175, %v1175
    %v1179 = vunpack.c.l.s4 1983009808
    %v1180 = vunpack.c.0.s8 %v1179
    %v1181 = vlaneseq
    %v1182 = vshrl.u32 %v1181, 7
    %v1183 = vsub.s32 %v1180, %v1182
    %v1184 = vrot.slane %v1175, %v1183
    %v1186 = vunpack.c.l.s4 1983009808
    %v1187 = vunpack.c.0.s8 %v1186
    %v1188 = vlaneseq
    %v1189 = vshrl.u32 %v1188, 7
    %v1190 = vsub.s32 %v1187, %v1189
    %v1191 = vrot.slane %v1177, %v1190
    %v1192 = vcombine.high %v1184, %v1184
    %v1193 = vcombine.high %v1191, %v1191
    %v1198 = vsel %vm993, %v1184, 0.0
    %v1199 = vsel %vm993, %v1192, 0.0
    %v1200 = vadd.f32 %v1198, %v1199
    %v1201 = vsel %vm993, %v1191, 0.0
    %v1202 = vadd.f32 %v1200, %v1201
    %v1203 = vsel %vm993, %v1193, 0.0
    %v1204 = vadd.f32 %v1202, %v1203
    %1205 = vadd.xlane.f32.xlu0 %v1204
    %v1206 = vpop.xlane.xlu0 %1205
    %v1207 = vmul.f32 %v910, %v1173
    %v1209 = vcombine.high %v1207, %v1207
    %v1211 = vunpack.c.l.s4 1983009808
    %v1212 = vunpack.c.0.s8 %v1211
    %v1213 = vlaneseq
    %v1214 = vshrl.u32 %v1213, 7
    %v1215 = vsub.s32 %v1212, %v1214
    %v1216 = vrot.slane %v1207, %v1215
    %v1218 = vunpack.c.l.s4 1983009808
    %v1219 = vunpack.c.0.s8 %v1218
    %v1220 = vlaneseq
    %v1221 = vshrl.u32 %v1220, 7
    %v1222 = vsub.s32 %v1219, %v1221
    %v1223 = vrot.slane %v1209, %v1222
    %v1224 = vcombine.high %v1216, %v1216
    %v1225 = vcombine.high %v1223, %v1223
    %v1230 = vsel %vm993, %v1216, 0.0
    %v1231 = vsel %vm993, %v1224, 0.0
    %v1232 = vadd.f32 %v1230, %v1231
    %v1233 = vsel %vm993, %v1223, 0.0
    %v1234 = vadd.f32 %v1232, %v1233
    %v1235 = vsel %vm993, %v1225, 0.0
    %v1236 = vadd.f32 %v1234, %v1235
    %1237 = vadd.xlane.f32.xlu0 %v1236
    %v1238 = vpop.xlane.xlu0 %1237
    %v1239 = vadd.f32 %v1206, %v1039
    %v1240 = vmax.f32 %v1239, 0.0
    %v1241 = vadd.f32 %v1238, %v1039
    %v1242 = vmax.f32 %v1241, 0.0
    %v1243 = vadd.f32 %v1240, %v1242
    %1245 = vset.pattern.permute.xlu0 1
    %1246 = vperm.xlu0 %1245, %v1243
    %v1247 = vpop.permute.xlu0 %1246
    %v1249 = vlaneseq
    %v1250 = vshrl.u32 %v1249, 7
    %v1251 = vsub.s32 1, %v1250
    %v1252 = vrot.slane %v75, %v1251
    %v1253 = vlaneseq
    %v1254 = vshrl.u32 %v1253, 7
    %v1255 = vsub.s32 3, %v1254
    %v1256 = vrot.slane %v75, %v1255
    %v1257 = vlaneseq
    %v1258 = vshrl.u32 %v1257, 7
    %v1259 = vsub.s32 5, %v1258
    %v1260 = vrot.slane %v75, %v1259
    %v1261 = vlaneseq
    %v1262 = vshrl.u32 %v1261, 7
    %v1263 = vsub.s32 7, %v1262
    %v1264 = vrot.slane %v75, %v1263
    %v1269 = vlaneseq
    %v1270 = vshrl.u32 %v1269, 7
    %v1271 = vsub.s32 1, %v1270
    %v1272 = vrot.slane %v1252, %v1271
    %v1273 = vlaneseq
    %v1274 = vshrl.u32 %v1273, 7
    %v1275 = vsub.s32 1, %v1274
    %v1276 = vrot.slane %v1256, %v1275
    %v1277 = vlaneseq
    %v1278 = vshrl.u32 %v1277, 7
    %v1279 = vsub.s32 1, %v1278
    %v1280 = vrot.slane %v1260, %v1279
    %v1281 = vlaneseq
    %v1282 = vshrl.u32 %v1281, 7
    %v1283 = vsub.s32 1, %v1282
    %v1284 = vrot.slane %v1264, %v1283
    %v1285 = vmul.f32 %v1247, %v1272
    %v1286 = vmul.f32 %v1247, %v1276
    %v1287 = vmul.f32 %v1247, %v1280
    %v1288 = vmul.f32 %v1247, %v1284
    %v1289 = vadd.f32 %v1113, %v1285
    %v1290 = vadd.f32 %v1114, %v1286
    %v1291 = vadd.f32 %v1115, %v1287
    %v1292 = vadd.f32 %v1116, %v1288
    %v1293 = vxor.u32 %v1289, 2147483648
    %v1294 = vxor.u32 %v1290, 2147483648
    %v1295 = vxor.u32 %v1291, 2147483648
    %v1296 = vxor.u32 %v1292, 2147483648
    %v1297 = vmul.f32 %v1293, 1.442695
    %v1298 = vpow.pop %v1297
    %v1299 = vmul.f32 %v1294, 1.442695
    %v1300 = vpow.pop %v1299
    %v1301 = vmul.f32 %v1295, 1.442695
    %v1302 = vpow.pop %v1301
    %v1303 = vmul.f32 %v1296, 1.442695
    %v1304 = vpow.pop %v1303
    %v1305 = vadd.f32 %v1298, 1.0
    %v1306 = vadd.f32 %v1300, 1.0
    %v1307 = vadd.f32 %v1302, 1.0
    %v1308 = vadd.f32 %v1304, 1.0
    %v1309 = vrcp.pop %v1305
    %v1310 = vmul.f32 1.0, %v1309
    %v1311 = vrcp.pop %v1306
    %v1312 = vmul.f32 1.0, %v1311
    %v1313 = vrcp.pop %v1307
    %v1314 = vmul.f32 1.0, %v1313
    %v1315 = vrcp.pop %v1308
    %v1316 = vmul.f32 1.0, %v1315
    %v1321 = vcombine.low %v1310, %v1312
    %v1322 = vcombine.low %v1314, %v1316
    %v1324 = vunpack.c.l.s4 1983009808
    %v1325 = vunpack.c.0.s8 %v1324
    %v1326 = vlaneseq
    %v1327 = vshrl.u32 %v1326, 7
    %v1328 = vsub.s32 %v1325, %v1327
    %v1329 = vrot.slane %v1321, %v1328
    %v1331 = vunpack.c.l.s4 1983009808
    %v1332 = vunpack.c.0.s8 %v1331
    %v1333 = vlaneseq
    %v1334 = vshrl.u32 %v1333, 7
    %v1335 = vsub.s32 %v1332, %v1334
    %v1336 = vrot.slane %v1322, %v1335
    %v1337 = vcombine.low %v1329, %v1336
    %v1339 = vmul.f32 %v71, %v1337
    %1340 = vst [vmem:[#allocation10] sm:$0xff] %v1339
    // Predicated region
    $region42: #{tpu_custom_call.1} parent=1 // pred_check
      _
    $region43: #{tpu_custom_call.1} parent=1 // pred_check_branch
      %1342 = sbr.rel (0) target = $region45
    $region44: #{tpu_custom_call.1} parent=1 // pred_region
      %s1344 = ssub.s32 128, 128
      %1345 = vsyncadd [#allocation4], %s1344
      %s1347 = sshll.u32 [#allocation10], 4
      %s1348 = int_to_ptr.vmem [resolvable:$true] %s1347
      %1350 = dma.vmem_to_hbm [thread:$0]  %s1348, 128, %s6, [#allocation4]
    $region45: #{tpu_custom_call.1} parent=1 // pred_fallthru
      _
    // Predicated region
    $region46: #{tpu_custom_call.1} parent=1 // pred_check
      _
    $region47: #{tpu_custom_call.1} parent=1 // pred_check_branch
      %1352 = sbr.rel (0) target = $region49
    $region48: #{tpu_custom_call.1} parent=1 // pred_region
      %1353 = dma.done [#allocation4], 128
    $region49: #{tpu_custom_call.1} parent=1 // pred_fallthru
      _
    %1354 = vsyncpa [#allocation3], 1
    %1355 = vsyncpa [#allocation6], 1
    %1356 = vsyncpa [#allocation9], 1
    %1357 = vsyncpa [#allocation4], 1

</llo_original>
